<compile_context>
chip_gen: v7x
topology: tpu7x:2x2x1
jax: 0.10.0
libtpu: 0.0.40
codegen_flags: <defaults>
</compile_context>

<pallas_src>
import functools

import jax
import jax.numpy as jnp
from jax.experimental import pallas as pl
from jax.experimental.pallas import tpu as pltpu


def _round_up(x, m):
    return ((x + m - 1) // m) * m


def _attention_kernel(q_ref, k_ref, v_ref, out_ref, aw_ref, *, scale):
    # Refs for one batch tile: q (Bt, Sq, D), k (Bt, Sk, D), v (Bt, Sk, Dv).
    q = q_ref[...]
    k = k_ref[...]
    v = v_ref[...]

    # Fold 1/sqrt(D) into q: touches Sq*D elements instead of Sq*Sk scores.
    q_scaled = q * jnp.asarray(scale, q.dtype)

    # q . k^T contracting the feature dim — no explicit k transpose; the MXU
    # consumes k directly in (Sk, D) layout via the einsum/dot_general.
    scores = jnp.einsum(
        "bqd,bkd->bqk", q_scaled, k, preferred_element_type=jnp.float32
    )  # (Bt, Sq, Sk) f32

    aw_ref[...] = scores.astype(aw_ref.dtype)

    # scores . v ; feed MXU operands in v's dtype (bf16-native path on
    # v6e/v7x when inputs are bf16), keep f32 accumulate. /400 -> one multiply.
    p = scores.astype(v.dtype)
    out = jnp.einsum("bqk,bkd->bqd", p, v, preferred_element_type=jnp.float32)
    out_ref[...] = (out * jnp.float32(1.0 / 400.0)).astype(out_ref.dtype)


def attention_forward(q, k, v, *, batch_tile=None, interpret=False):
    """Pallas forward for AttentionModel.

    q: (B, Sq, D), k: (B, Sk, D), v: (B, Sk, Dv)
    returns (out (B, Sq, Dv), attention_weights (B, Sq, Sk))
    """
    B, Sq, D = q.shape
    Bk, Sk, Dk = k.shape
    Bv, Skv, Dv = v.shape
    assert B == Bk == Bv and Sk == Skv and D == Dk

    # Pad seq dims to the sublane quantum (8) and the OUTPUT lane dims
    # (Sk for attention_weights, Dv for out) to the lane quantum (128) so all
    # stores are unmasked, lane-dense vst. Padding is skipped when already
    # aligned; pad rows/cols are zeros so the math is unchanged, and they are
    # sliced off after the call.
    Sq_p = _round_up(Sq, 8)
    Sk_p = _round_up(Sk, 128)
    Dv_p = _round_up(Dv, 128)

    q_p = q if Sq_p == Sq else jnp.pad(q, ((0, 0), (0, Sq_p - Sq), (0, 0)))
    k_p = k if Sk_p == Sk else jnp.pad(k, ((0, 0), (0, Sk_p - Sk), (0, 0)))
    if Sk_p == Sk and Dv_p == Dv:
        v_p = v
    else:
        v_p = jnp.pad(v, ((0, 0), (0, Sk_p - Sk), (0, Dv_p - Dv)))

    # Amortize the ~0.35us per-grid-step overhead: pack as many batch elements
    # per step as comfortably fit in VMEM (tiles are double-buffered by the
    # pipeline). At the toy shapes this collapses to a single grid step.
    elem_bytes = jnp.dtype(q.dtype).itemsize
    per_elem = elem_bytes * (
        Sq_p * D + Sk_p * D + Sk_p * Dv_p + Sq_p * Dv_p + Sq_p * Sk_p
    )
    if batch_tile is None:
        budget = 8 * 1024 * 1024  # live-tile budget, well under scoped VMEM limits
        batch_tile = max(1, min(B, budget // max(per_elem, 1)))
    while B % batch_tile != 0:  # full blocks only
        batch_tile -= 1
    grid = (B // batch_tile,)

    scale = 1.0 / float(D) ** 0.5
    kernel = functools.partial(_attention_kernel, scale=scale)

    out_p, aw_p = pl.pallas_call(
        kernel,
        out_shape=(
            jax.ShapeDtypeStruct((B, Sq_p, Dv_p), q.dtype),  # out (padded)
            jax.ShapeDtypeStruct((B, Sq_p, Sk_p), q.dtype),  # attn weights (padded)
        ),
        grid_spec=pl.GridSpec(
            grid=grid,
            in_specs=[
                pl.BlockSpec((batch_tile, Sq_p, D), lambda b: (b, 0, 0)),
                pl.BlockSpec((batch_tile, Sk_p, D), lambda b: (b, 0, 0)),
                pl.BlockSpec((batch_tile, Sk_p, Dv_p), lambda b: (b, 0, 0)),
            ],
            out_specs=(
                pl.BlockSpec((batch_tile, Sq_p, Dv_p), lambda b: (b, 0, 0)),
                pl.BlockSpec((batch_tile, Sq_p, Sk_p), lambda b: (b, 0, 0)),
            ),
        ),
        compiler_params=pltpu.CompilerParams(
            # Batch-tile axis is independent -> shard across v7x's two TCs
            # when the grid extent is >= 2 (free/no-op on v5e/v6e).
            dimension_semantics=("parallel",),
        ),
        interpret=interpret,
    )(q_p, k_p, v_p)

    out = out_p[:, :Sq, :Dv]
    aw = aw_p[:, :Sq, :Sk]
    return out, aw


def init_params(key, input_size, hidden_size):
    # TODO(synk): AttentionModel.__init__ creates query/key/value/out Linear
    # layers that forward() never uses; only their init is mirrored here.
    ks = jax.random.split(key, 8)

    def lin(kw, kb, fan_in, fan_out):
        bound = 1.0 / (fan_in ** 0.5)
        w = jax.random.uniform(kw, (fan_out, fan_in), jnp.float32, -bound, bound)
        b = jax.random.uniform(kb, (fan_out,), jnp.float32, -bound, bound)
        return w, b

    return {
        "query": lin(ks[0], ks[1], input_size, hidden_size),
        "key": lin(ks[2], ks[3], input_size, hidden_size),
        "value": lin(ks[4], ks[5], input_size, hidden_size),
        "out": lin(ks[6], ks[7], hidden_size, input_size),
    }


if __name__ == "__main__":
    key = jax.random.PRNGKey(0)
    k_params, kq, kk, kv = jax.random.split(key, 4)

    input_size, hidden_size = 32, 32
    B, S, D = 2, 8, 32

    _params = init_params(k_params, input_size, hidden_size)  # unused by forward

    q = jax.random.normal(kq, (B, S, D), jnp.float32)
    k = jax.random.normal(kk, (B, S, D), jnp.float32)
    v = jax.random.normal(kv, (B, S, D), jnp.float32)

    out, attn_w = attention_forward(q, k, v)
    out, attn_w = jax.block_until_ready((out, attn_w))

    # Reference check in plain JAX (matches the torch forward).
    ref_w = jnp.einsum("bqd,bkd->bqk", q, k) / (D ** 0.5)
    ref_out = jnp.einsum("bqk,bkd->bqd", ref_w, v) / 400.0
    assert out.shape == (B, S, D) and attn_w.shape == (B, S, S)
    assert jnp.allclose(attn_w, ref_w, atol=1e-4, rtol=1e-5)
    assert jnp.allclose(out, ref_out, atol=1e-4, rtol=1e-5)

    print("KERNEL_OK")
</pallas_src>

<mosaic_0001>
module attributes {stable_mosaic.version = 11 : i64} {
  func.func @_attention_kernel(%arg0: i32, %arg1: memref<2x8x32xf32, #tpu.memory_space<vmem>>, %arg2: memref<2x128x32xf32, #tpu.memory_space<vmem>>, %arg3: memref<2x128x128xf32, #tpu.memory_space<vmem>>, %arg4: memref<2x8x128xf32, #tpu.memory_space<vmem>>, %arg5: memref<2x8x128xf32, #tpu.memory_space<vmem>>) attributes {dimension_semantics = [#tpu.dimension_semantics<parallel>], iteration_bounds = array<i64: 1>, scalar_prefetch = 0 : i64, scratch_operands = 0 : i64, tpu.core_type = #tpu.core_type<tc>, window_params = [{transform_indices = @transform_0, window_bounds = array<i64: 2, 8, 32>}, {transform_indices = @transform_1, window_bounds = array<i64: 2, 128, 32>}, {transform_indices = @transform_2, window_bounds = array<i64: 2, 128, 128>}, {transform_indices = @transform_3, window_bounds = array<i64: 2, 8, 128>}, {transform_indices = @transform_4, window_bounds = array<i64: 2, 8, 128>}]} {
    %c0 = arith.constant 0 : index
    %c0_0 = arith.constant 0 : index
    %c0_1 = arith.constant 0 : index
    %0 = vector.load %arg1[%c0, %c0_0, %c0_1] : memref<2x8x32xf32, #tpu.memory_space<vmem>>, vector<2x8x32xf32>
    %c0_2 = arith.constant 0 : index
    %c0_3 = arith.constant 0 : index
    %c0_4 = arith.constant 0 : index
    %1 = vector.load %arg2[%c0_2, %c0_3, %c0_4] : memref<2x128x32xf32, #tpu.memory_space<vmem>>, vector<2x128x32xf32>
    %c0_5 = arith.constant 0 : index
    %c0_6 = arith.constant 0 : index
    %c0_7 = arith.constant 0 : index
    %2 = vector.load %arg3[%c0_5, %c0_6, %c0_7] : memref<2x128x128xf32, #tpu.memory_space<vmem>>, vector<2x128x128xf32>
    %cst = arith.constant 0.176776692 : f32
    %3 = vector.broadcast %cst : f32 to vector<2x8x32xf32>
    %4 = arith.mulf %0, %3 : vector<2x8x32xf32>
    "tpu.trace_start"() <{level = 10 : i32, message = "bqd,bkd->bqk"}> : () -> ()
    %cst_8 = arith.constant dense<0.000000e+00> : vector<2x8x128xf32>
    %5 = tpu.matmul %4, %1, %cst_8 {dimension_numbers = #tpu.dot_dimension_numbers<[2], [2], [1], [1], [0, 0, 0, 1, 1, 1], [0], [0]>} : vector<2x8x32xf32>, vector<2x128x32xf32>, vector<2x8x128xf32> -> vector<2x8x128xf32>
    "tpu.trace_stop"() : () -> ()
    %c0_9 = arith.constant 0 : index
    %c0_10 = arith.constant 0 : index
    %c0_11 = arith.constant 0 : index
    %6 = vector.load %arg5[%c0_9, %c0_10, %c0_11] : memref<2x8x128xf32, #tpu.memory_space<vmem>>, vector<2x8x128xf32>
    tpu.vector_store %arg5[%c0_9, %c0_10, %c0_11], %5 {strides = array<i32>} : memref<2x8x128xf32, #tpu.memory_space<vmem>>, vector<2x8x128xf32>,
    "tpu.trace_start"() <{level = 10 : i32, message = "bqk,bkd->bqd"}> : () -> ()
    %cst_12 = arith.constant dense<0.000000e+00> : vector<2x8x128xf32>
    %7 = tpu.matmul %5, %2, %cst_12 {dimension_numbers = #tpu.dot_dimension_numbers<[2], [1], [1], [2], [0, 0, 0, 1, 1, 2], [0], [0]>} : vector<2x8x128xf32>, vector<2x128x128xf32>, vector<2x8x128xf32> -> vector<2x8x128xf32>
    "tpu.trace_stop"() : () -> ()
    %cst_13 = arith.constant 2.500000e-03 : f32
    %8 = vector.broadcast %cst_13 : f32 to vector<2x8x128xf32>
    %9 = arith.mulf %7, %8 : vector<2x8x128xf32>
    %c0_14 = arith.constant 0 : index
    %c0_15 = arith.constant 0 : index
    %c0_16 = arith.constant 0 : index
    %10 = vector.load %arg4[%c0_14, %c0_15, %c0_16] : memref<2x8x128xf32, #tpu.memory_space<vmem>>, vector<2x8x128xf32>
    tpu.vector_store %arg4[%c0_14, %c0_15, %c0_16], %9 {strides = array<i32>} : memref<2x8x128xf32, #tpu.memory_space<vmem>>, vector<2x8x128xf32>,
    return
  }
  func.func @transform_0(%arg0: i32) -> (i32, i32, i32) {
    %c0_i32 = arith.constant 0 : i32
    %c0_i32_0 = arith.constant 0 : i32
    %c0_i32_1 = arith.constant 0 : i32
    return %arg0, %c0_i32, %c0_i32_0 : i32, i32, i32
  }
  func.func @transform_1(%arg0: i32) -> (i32, i32, i32) {
    %c0_i32 = arith.constant 0 : i32
    %c0_i32_0 = arith.constant 0 : i32
    %c0_i32_1 = arith.constant 0 : i32
    return %arg0, %c0_i32, %c0_i32_0 : i32, i32, i32
  }
  func.func @transform_2(%arg0: i32) -> (i32, i32, i32) {
    %c0_i32 = arith.constant 0 : i32
    %c0_i32_0 = arith.constant 0 : i32
    %c0_i32_1 = arith.constant 0 : i32
    return %arg0, %c0_i32, %c0_i32_0 : i32, i32, i32
  }
  func.func @transform_3(%arg0: i32) -> (i32, i32, i32) {
    %c0_i32 = arith.constant 0 : i32
    %c0_i32_0 = arith.constant 0 : i32
    %c0_i32_1 = arith.constant 0 : i32
    return %arg0, %c0_i32, %c0_i32_0 : i32, i32, i32
  }
  func.func @transform_4(%arg0: i32) -> (i32, i32, i32) {
    %c0_i32 = arith.constant 0 : i32
    %c0_i32_0 = arith.constant 0 : i32
    %c0_i32_1 = arith.constant 0 : i32
    return %arg0, %c0_i32, %c0_i32_0 : i32, i32, i32
  }
}

</mosaic_0001>

<llo_original>
// kernel: tpu_custom_call.1
$region0: #{tpu_custom_call.1}
  #allocation0 [shape = 'u32[]', space=smem, size = 0x4, offset = 0x4, fixed_abs, tag = 'smem constant byte address 0x4 - core index']
  #allocation1 [shape = 'u32[144,128]{1,0:T(1,128)}', space=vmem, size = 0x12000, scoped, tag = 'internal scratch']
  %s0 = inlined_call_operand.vmem [shape: f32[2,8,32], index: 0, kind: input, shape index: {}]
  %s1 = inlined_call_operand.vmem [shape: f32[2,128,32], index: 1, kind: input, shape index: {}]
  %s2 = inlined_call_operand.vmem [shape: f32[2,128,128], index: 2, kind: input, shape index: {}]
  %s3 = inlined_call_operand.hbm [shape: f32[2,8,128], index: 3, kind: output, shape index: {0}]
  %s4 = inlined_call_operand.hbm [shape: f32[2,8,128], index: 4, kind: output, shape index: {1}]
  %5 = xla_tuple %s3, %s4
  %s6 = sld [smem:[#allocation0]]
  $region30: #{tpu_custom_call.1} parent=0
    _
  %s8 = ssub.s32 1, %s6
  %s9 = scalar_select 0, %s8, %s6
  $region1: #{tpu_custom_call.1} parent=0
    #allocation2 [shape = 'u8[8192]{0}', space=vmem, size = 0x2000, scoped, tag = 'output window, operand 0, single buffered']
    #allocation3 [shape = 's32[1]{0}', space=sflag, size = 0x4, scoped, tag = 'scoped memory for tpu_custom_call.1']
    #allocation4 [shape = 'u8[8192]{0}', space=vmem, size = 0x2000, scoped, tag = 'output window, operand 1, single buffered']
    #allocation5 [shape = 's32[1]{0}', space=sflag, size = 0x4, scoped, tag = 'scoped memory for tpu_custom_call.1']
    %10 = vsyncpa [#allocation3], 0
    %11 = vsyncpa [#allocation5], 0
    // Predicated region
    $region2: #{tpu_custom_call.1} parent=1 // pred_check
      _
    $region3: #{tpu_custom_call.1} parent=1 // pred_check_branch
      %13 = sbr.rel (0) target = $region5
    $region4: #{tpu_custom_call.1} parent=1 // pred_region
      _
    $region5: #{tpu_custom_call.1} parent=1 // pred_fallthru
      _
    // Predicated region
    $region6: #{tpu_custom_call.1} parent=1 // pred_check
      _
    $region7: #{tpu_custom_call.1} parent=1 // pred_check_branch
      %15 = sbr.rel (0) target = $region9
    $region8: #{tpu_custom_call.1} parent=1 // pred_region
      _
    $region9: #{tpu_custom_call.1} parent=1 // pred_fallthru
      _
    // Predicated region
    $region10: #{tpu_custom_call.1} parent=1 // pred_check
      _
    $region11: #{tpu_custom_call.1} parent=1 // pred_check_branch
      %17 = sbr.rel (0) target = $region13
    $region12: #{tpu_custom_call.1} parent=1 // pred_region
      _
    $region13: #{tpu_custom_call.1} parent=1 // pred_fallthru
      _
    %v18 = vld [vmem:[%s0] sm:$0xff]
    %v19 = vld [vmem:[%s0 + $0x8] sm:$0xff]
    %v20 = vld [vmem:[%s1] sm:$0xff]
    %v21 = vld [vmem:[%s1 + $0x8] sm:$0xff]
    %v22 = vld [vmem:[%s1 + $0x10] sm:$0xff]
    %v23 = vld [vmem:[%s1 + $0x18] sm:$0xff]
    %v24 = vld [vmem:[%s1 + $0x20] sm:$0xff]
    %v25 = vld [vmem:[%s1 + $0x28] sm:$0xff]
    %v26 = vld [vmem:[%s1 + $0x30] sm:$0xff]
    %v27 = vld [vmem:[%s1 + $0x38] sm:$0xff]
    %v28 = vld [vmem:[%s1 + $0x40] sm:$0xff]
    %v29 = vld [vmem:[%s1 + $0x48] sm:$0xff]
    %v30 = vld [vmem:[%s1 + $0x50] sm:$0xff]
    %v31 = vld [vmem:[%s1 + $0x58] sm:$0xff]
    %v32 = vld [vmem:[%s1 + $0x60] sm:$0xff]
    %v33 = vld [vmem:[%s1 + $0x68] sm:$0xff]
    %v34 = vld [vmem:[%s1 + $0x70] sm:$0xff]
    %v35 = vld [vmem:[%s1 + $0x78] sm:$0xff]
    %v36 = vld [vmem:[%s1 + $0x80] sm:$0xff]
    %v37 = vld [vmem:[%s1 + $0x88] sm:$0xff]
    %v38 = vld [vmem:[%s1 + $0x90] sm:$0xff]
    %v39 = vld [vmem:[%s1 + $0x98] sm:$0xff]
    %v40 = vld [vmem:[%s1 + $0xa0] sm:$0xff]
    %v41 = vld [vmem:[%s1 + $0xa8] sm:$0xff]
    %v42 = vld [vmem:[%s1 + $0xb0] sm:$0xff]
    %v43 = vld [vmem:[%s1 + $0xb8] sm:$0xff]
    %v44 = vld [vmem:[%s1 + $0xc0] sm:$0xff]
    %v45 = vld [vmem:[%s1 + $0xc8] sm:$0xff]
    %v46 = vld [vmem:[%s1 + $0xd0] sm:$0xff]
    %v47 = vld [vmem:[%s1 + $0xd8] sm:$0xff]
    %v48 = vld [vmem:[%s1 + $0xe0] sm:$0xff]
    %v49 = vld [vmem:[%s1 + $0xe8] sm:$0xff]
    %v50 = vld [vmem:[%s1 + $0xf0] sm:$0xff]
    %v51 = vld [vmem:[%s1 + $0xf8] sm:$0xff]
    %v52 = vld [vmem:[%s2] sm:$0xff]
    %v53 = vld [vmem:[%s2 + $0x8] sm:$0xff]
    %v54 = vld [vmem:[%s2 + $0x10] sm:$0xff]
    %v55 = vld [vmem:[%s2 + $0x18] sm:$0xff]
    %v56 = vld [vmem:[%s2 + $0x20] sm:$0xff]
    %v57 = vld [vmem:[%s2 + $0x28] sm:$0xff]
    %v58 = vld [vmem:[%s2 + $0x30] sm:$0xff]
    %v59 = vld [vmem:[%s2 + $0x38] sm:$0xff]
    %v60 = vld [vmem:[%s2 + $0x40] sm:$0xff]
    %v61 = vld [vmem:[%s2 + $0x48] sm:$0xff]
    %v62 = vld [vmem:[%s2 + $0x50] sm:$0xff]
    %v63 = vld [vmem:[%s2 + $0x58] sm:$0xff]
    %v64 = vld [vmem:[%s2 + $0x60] sm:$0xff]
    %v65 = vld [vmem:[%s2 + $0x68] sm:$0xff]
    %v66 = vld [vmem:[%s2 + $0x70] sm:$0xff]
    %v67 = vld [vmem:[%s2 + $0x78] sm:$0xff]
    %v68 = vld [vmem:[%s2 + $0x80] sm:$0xff]
    %v69 = vld [vmem:[%s2 + $0x88] sm:$0xff]
    %v70 = vld [vmem:[%s2 + $0x90] sm:$0xff]
    %v71 = vld [vmem:[%s2 + $0x98] sm:$0xff]
    %v72 = vld [vmem:[%s2 + $0xa0] sm:$0xff]
    %v73 = vld [vmem:[%s2 + $0xa8] sm:$0xff]
    %v74 = vld [vmem:[%s2 + $0xb0] sm:$0xff]
    %v75 = vld [vmem:[%s2 + $0xb8] sm:$0xff]
    %v76 = vld [vmem:[%s2 + $0xc0] sm:$0xff]
    %v77 = vld [vmem:[%s2 + $0xc8] sm:$0xff]
    %v78 = vld [vmem:[%s2 + $0xd0] sm:$0xff]
    %v79 = vld [vmem:[%s2 + $0xd8] sm:$0xff]
    %v80 = vld [vmem:[%s2 + $0xe0] sm:$0xff]
    %v81 = vld [vmem:[%s2 + $0xe8] sm:$0xff]
    %v82 = vld [vmem:[%s2 + $0xf0] sm:$0xff]
    %v83 = vld [vmem:[%s2 + $0xf8] sm:$0xff]
    %v84 = vmul.f32 %v18, 0.17677669
    %v85 = vmul.f32 %v19, 0.17677669
    %vm86 = vcmask 261120
    %v88 = vsel %vm86, %v84, 0
    %v91 = vsel %vm86, %v20, 0
    %v94 = vsel %vm86, %v21, 0
    %v97 = vsel %vm86, %v22, 0
    %v100 = vsel %vm86, %v23, 0
    %v103 = vsel %vm86, %v24, 0
    %v106 = vsel %vm86, %v25, 0
    %v109 = vsel %vm86, %v26, 0
    %v112 = vsel %vm86, %v27, 0
    %v115 = vsel %vm86, %v28, 0
    %v118 = vsel %vm86, %v29, 0
    %v121 = vsel %vm86, %v30, 0
    %v124 = vsel %vm86, %v31, 0
    %v127 = vsel %vm86, %v32, 0
    %v130 = vsel %vm86, %v33, 0
    %v133 = vsel %vm86, %v34, 0
    %v136 = vsel %vm86, %v35, 0
    %138 = vmatprep.subr.mxu0 0.0
    %139 = vmatpush1.xpose.msra.mxu0 %v91
    %140 = vmatprep.subr.mxu0 0.0
    %141 = vmatpush1.xpose.msra.mxu0 %v94
    %142 = vmatprep.subr.mxu0 0.0
    %143 = vmatpush1.xpose.msra.mxu0 %v97
    %144 = vmatprep.subr.mxu0 0.0
    %145 = vmatpush1.xpose.msra.mxu0 %v100
    %146 = vmatprep.subr.mxu0 0.0
    %147 = vmatpush1.xpose.msra.mxu0 %v103
    %148 = vmatprep.subr.mxu0 0.0
    %149 = vmatpush1.xpose.msra.mxu0 %v106
    %150 = vmatprep.subr.mxu0 0.0
    %151 = vmatpush1.xpose.msra.mxu0 %v109
    %152 = vmatprep.subr.mxu0 0.0
    %153 = vmatpush1.xpose.msra.mxu0 %v112
    %154 = vmatprep.subr.mxu0 0.0
    %155 = vmatpush1.xpose.msra.mxu0 %v115
    %156 = vmatprep.subr.mxu0 0.0
    %157 = vmatpush1.xpose.msra.mxu0 %v118
    %158 = vmatprep.subr.mxu0 0.0
    %159 = vmatpush1.xpose.msra.mxu0 %v121
    %160 = vmatprep.subr.mxu0 0.0
    %161 = vmatpush1.xpose.msra.mxu0 %v124
    %162 = vmatprep.subr.mxu0 0.0
    %163 = vmatpush1.xpose.msra.mxu0 %v127
    %164 = vmatprep.subr.mxu0 0.0
    %165 = vmatpush1.xpose.msra.mxu0 %v130
    %166 = vmatprep.subr.mxu0 0.0
    %167 = vmatpush1.xpose.msra.mxu0 %v133
    %168 = vmatprep.subr.mxu0 0.0
    %169 = vmatpush1.xpose.msra.mxu0 %v136
    %170 = vmatprep.subr.mxu0 0.0
    %171 = vmatpush1.xpose.msra.mxu0 0.0
    %172 = vmatprep.subr.mxu0 0.0
    %173 = vmatpush1.xpose.msra.mxu0 0.0
    %174 = vmatprep.subr.mxu0 0.0
    %175 = vmatpush1.xpose.msra.mxu0 0.0
    %176 = vmatprep.subr.mxu0 0.0
    %177 = vmatpush1.xpose.msra.mxu0 0.0
    %178 = vmatprep.subr.mxu0 0.0
    %179 = vmatpush1.xpose.msra.mxu0 0.0
    %180 = vmatprep.subr.mxu0 0.0
    %181 = vmatpush1.xpose.msra.mxu0 0.0
    %182 = vmatprep.subr.mxu0 0.0
    %183 = vmatpush1.xpose.msra.mxu0 0.0
    %184 = vmatprep.subr.mxu0 0.0
    %185 = vmatpush1.xpose.msra.mxu0 0.0
    %186 = vmatprep.subr.mxu0 0.0
    %187 = vmatpush1.xpose.msra.mxu0 0.0
    %188 = vmatprep.subr.mxu0 0.0
    %189 = vmatpush1.xpose.msra.mxu0 0.0
    %190 = vmatprep.subr.mxu0 0.0
    %191 = vmatpush1.xpose.msra.mxu0 0.0
    %192 = vmatprep.subr.mxu0 0.0
    %193 = vmatpush1.xpose.msra.mxu0 0.0
    %194 = vmatprep.subr.mxu0 0.0
    %195 = vmatpush1.xpose.msra.mxu0 0.0
    %196 = vmatprep.subr.mxu0 0.0
    %197 = vmatpush1.xpose.msra.mxu0 0.0
    %198 = vmatprep.subr.mxu0 0.0
    %199 = vmatpush1.xpose.msra.mxu0 0.0
    %200 = vmatprep.subr.mxu0 0.0
    %201 = vmatpush1.xpose.msra.mxu0 0.0
    %202 = vmatprep.mubr.f32.mxu0 0.0
    %203 = vmatmul.mubr.f32.gmra.mrb[0].mxu0 %v88
    %v204 = vpop.f32.mrb[0].mxu0
    %v205 = vadd.f32 0.0, %v204
    %v206 = vpop.f32.mrb[0].mxu0
    %207 = vdwg.mxu0
    %v209 = vsel %vm86, %v85, 0
    %v212 = vsel %vm86, %v36, 0
    %v215 = vsel %vm86, %v37, 0
    %v218 = vsel %vm86, %v38, 0
    %v221 = vsel %vm86, %v39, 0
    %v224 = vsel %vm86, %v40, 0
    %v227 = vsel %vm86, %v41, 0
    %v230 = vsel %vm86, %v42, 0
    %v233 = vsel %vm86, %v43, 0
    %v236 = vsel %vm86, %v44, 0
    %v239 = vsel %vm86, %v45, 0
    %v242 = vsel %vm86, %v46, 0
    %v245 = vsel %vm86, %v47, 0
    %v248 = vsel %vm86, %v48, 0
    %v251 = vsel %vm86, %v49, 0
    %v254 = vsel %vm86, %v50, 0
    %v257 = vsel %vm86, %v51, 0
    %259 = vmatprep.subr.mxu0 0.0
    %260 = vmatpush1.xpose.msra.mxu0 %v212
    %261 = vmatprep.subr.mxu0 0.0
    %262 = vmatpush1.xpose.msra.mxu0 %v215
    %263 = vmatprep.subr.mxu0 0.0
    %264 = vmatpush1.xpose.msra.mxu0 %v218
    %265 = vmatprep.subr.mxu0 0.0
    %266 = vmatpush1.xpose.msra.mxu0 %v221
    %267 = vmatprep.subr.mxu0 0.0
    %268 = vmatpush1.xpose.msra.mxu0 %v224
    %269 = vmatprep.subr.mxu0 0.0
    %270 = vmatpush1.xpose.msra.mxu0 %v227
    %271 = vmatprep.subr.mxu0 0.0
    %272 = vmatpush1.xpose.msra.mxu0 %v230
    %273 = vmatprep.subr.mxu0 0.0
    %274 = vmatpush1.xpose.msra.mxu0 %v233
    %275 = vmatprep.subr.mxu0 0.0
    %276 = vmatpush1.xpose.msra.mxu0 %v236
    %277 = vmatprep.subr.mxu0 0.0
    %278 = vmatpush1.xpose.msra.mxu0 %v239
    %279 = vmatprep.subr.mxu0 0.0
    %280 = vmatpush1.xpose.msra.mxu0 %v242
    %281 = vmatprep.subr.mxu0 0.0
    %282 = vmatpush1.xpose.msra.mxu0 %v245
    %283 = vmatprep.subr.mxu0 0.0
    %284 = vmatpush1.xpose.msra.mxu0 %v248
    %285 = vmatprep.subr.mxu0 0.0
    %286 = vmatpush1.xpose.msra.mxu0 %v251
    %287 = vmatprep.subr.mxu0 0.0
    %288 = vmatpush1.xpose.msra.mxu0 %v254
    %289 = vmatprep.subr.mxu0 0.0
    %290 = vmatpush1.xpose.msra.mxu0 %v257
    %291 = vmatprep.subr.mxu0 0.0
    %292 = vmatpush1.xpose.msra.mxu0 0.0
    %293 = vmatprep.subr.mxu0 0.0
    %294 = vmatpush1.xpose.msra.mxu0 0.0
    %295 = vmatprep.subr.mxu0 0.0
    %296 = vmatpush1.xpose.msra.mxu0 0.0
    %297 = vmatprep.subr.mxu0 0.0
    %298 = vmatpush1.xpose.msra.mxu0 0.0
    %299 = vmatprep.subr.mxu0 0.0
    %300 = vmatpush1.xpose.msra.mxu0 0.0
    %301 = vmatprep.subr.mxu0 0.0
    %302 = vmatpush1.xpose.msra.mxu0 0.0
    %303 = vmatprep.subr.mxu0 0.0
    %304 = vmatpush1.xpose.msra.mxu0 0.0
    %305 = vmatprep.subr.mxu0 0.0
    %306 = vmatpush1.xpose.msra.mxu0 0.0
    %307 = vmatprep.subr.mxu0 0.0
    %308 = vmatpush1.xpose.msra.mxu0 0.0
    %309 = vmatprep.subr.mxu0 0.0
    %310 = vmatpush1.xpose.msra.mxu0 0.0
    %311 = vmatprep.subr.mxu0 0.0
    %312 = vmatpush1.xpose.msra.mxu0 0.0
    %313 = vmatprep.subr.mxu0 0.0
    %314 = vmatpush1.xpose.msra.mxu0 0.0
    %315 = vmatprep.subr.mxu0 0.0
    %316 = vmatpush1.xpose.msra.mxu0 0.0
    %317 = vmatprep.subr.mxu0 0.0
    %318 = vmatpush1.xpose.msra.mxu0 0.0
    %319 = vmatprep.subr.mxu0 0.0
    %320 = vmatpush1.xpose.msra.mxu0 0.0
    %321 = vmatprep.subr.mxu0 0.0
    %322 = vmatpush1.xpose.msra.mxu0 0.0
    %323 = vmatprep.mubr.f32.mxu0 0.0
    %324 = vmatmul.mubr.f32.gmra.mrb[0].mxu0 %v209
    %v325 = vpop.f32.mrb[0].mxu0
    %v326 = vadd.f32 0.0, %v325
    %v327 = vpop.f32.mrb[0].mxu0
    %328 = vdwg.mxu0
    %329 = vst [vmem:[#allocation4] sm:$0xff] %v205
    %330 = vst [vmem:[#allocation4 + $0x8] sm:$0xff] %v326
    %331 = vmatprep.subr.mxu0 0.0
    %332 = vmatpush1.msra.mxu0 %v52
    %333 = vmatprep.subr.mxu0 0.0
    %334 = vmatpush1.msra.mxu0 %v53
    %335 = vmatprep.subr.mxu0 0.0
    %336 = vmatpush1.msra.mxu0 %v54
    %337 = vmatprep.subr.mxu0 0.0
    %338 = vmatpush1.msra.mxu0 %v55
    %339 = vmatprep.subr.mxu0 0.0
    %340 = vmatpush1.msra.mxu0 %v56
    %341 = vmatprep.subr.mxu0 0.0
    %342 = vmatpush1.msra.mxu0 %v57
    %343 = vmatprep.subr.mxu0 0.0
    %344 = vmatpush1.msra.mxu0 %v58
    %345 = vmatprep.subr.mxu0 0.0
    %346 = vmatpush1.msra.mxu0 %v59
    %347 = vmatprep.subr.mxu0 0.0
    %348 = vmatpush1.msra.mxu0 %v60
    %349 = vmatprep.subr.mxu0 0.0
    %350 = vmatpush1.msra.mxu0 %v61
    %351 = vmatprep.subr.mxu0 0.0
    %352 = vmatpush1.msra.mxu0 %v62
    %353 = vmatprep.subr.mxu0 0.0
    %354 = vmatpush1.msra.mxu0 %v63
    %355 = vmatprep.subr.mxu0 0.0
    %356 = vmatpush1.msra.mxu0 %v64
    %357 = vmatprep.subr.mxu0 0.0
    %358 = vmatpush1.msra.mxu0 %v65
    %359 = vmatprep.subr.mxu0 0.0
    %360 = vmatpush1.msra.mxu0 %v66
    %361 = vmatprep.subr.mxu0 0.0
    %362 = vmatpush1.msra.mxu0 %v67
    %363 = vmatprep.subr.mxu0 0.0
    %364 = vmatpush1.msra.mxu0 0.0
    %365 = vmatprep.subr.mxu0 0.0
    %366 = vmatpush1.msra.mxu0 0.0
    %367 = vmatprep.subr.mxu0 0.0
    %368 = vmatpush1.msra.mxu0 0.0
    %369 = vmatprep.subr.mxu0 0.0
    %370 = vmatpush1.msra.mxu0 0.0
    %371 = vmatprep.subr.mxu0 0.0
    %372 = vmatpush1.msra.mxu0 0.0
    %373 = vmatprep.subr.mxu0 0.0
    %374 = vmatpush1.msra.mxu0 0.0
    %375 = vmatprep.subr.mxu0 0.0
    %376 = vmatpush1.msra.mxu0 0.0
    %377 = vmatprep.subr.mxu0 0.0
    %378 = vmatpush1.msra.mxu0 0.0
    %379 = vmatprep.subr.mxu0 0.0
    %380 = vmatpush1.msra.mxu0 0.0
    %381 = vmatprep.subr.mxu0 0.0
    %382 = vmatpush1.msra.mxu0 0.0
    %383 = vmatprep.subr.mxu0 0.0
    %384 = vmatpush1.msra.mxu0 0.0
    %385 = vmatprep.subr.mxu0 0.0
    %386 = vmatpush1.msra.mxu0 0.0
    %387 = vmatprep.subr.mxu0 0.0
    %388 = vmatpush1.msra.mxu0 0.0
    %389 = vmatprep.subr.mxu0 0.0
    %390 = vmatpush1.msra.mxu0 0.0
    %391 = vmatprep.subr.mxu0 0.0
    %392 = vmatpush1.msra.mxu0 0.0
    %393 = vmatprep.subr.mxu0 0.0
    %394 = vmatpush1.msra.mxu0 0.0
    %395 = vmatprep.mubr.f32.mxu0 0.0
    %396 = vmatmul.mubr.f32.gmra.mrb[0].mxu0 %v205
    %v397 = vpop.f32.mrb[0].mxu0
    %v398 = vadd.f32 0.0, %v397
    %v399 = vpop.f32.mrb[0].mxu0
    %400 = vdwg.mxu0
    %401 = vmatprep.subr.mxu0 0.0
    %402 = vmatpush1.msra.mxu0 %v68
    %403 = vmatprep.subr.mxu0 0.0
    %404 = vmatpush1.msra.mxu0 %v69
    %405 = vmatprep.subr.mxu0 0.0
    %406 = vmatpush1.msra.mxu0 %v70
    %407 = vmatprep.subr.mxu0 0.0
    %408 = vmatpush1.msra.mxu0 %v71
    %409 = vmatprep.subr.mxu0 0.0
    %410 = vmatpush1.msra.mxu0 %v72
    %411 = vmatprep.subr.mxu0 0.0
    %412 = vmatpush1.msra.mxu0 %v73
    %413 = vmatprep.subr.mxu0 0.0
    %414 = vmatpush1.msra.mxu0 %v74
    %415 = vmatprep.subr.mxu0 0.0
    %416 = vmatpush1.msra.mxu0 %v75
    %417 = vmatprep.subr.mxu0 0.0
    %418 = vmatpush1.msra.mxu0 %v76
    %419 = vmatprep.subr.mxu0 0.0
    %420 = vmatpush1.msra.mxu0 %v77
    %421 = vmatprep.subr.mxu0 0.0
    %422 = vmatpush1.msra.mxu0 %v78
    %423 = vmatprep.subr.mxu0 0.0
    %424 = vmatpush1.msra.mxu0 %v79
    %425 = vmatprep.subr.mxu0 0.0
    %426 = vmatpush1.msra.mxu0 %v80
    %427 = vmatprep.subr.mxu0 0.0
    %428 = vmatpush1.msra.mxu0 %v81
    %429 = vmatprep.subr.mxu0 0.0
    %430 = vmatpush1.msra.mxu0 %v82
    %431 = vmatprep.subr.mxu0 0.0
    %432 = vmatpush1.msra.mxu0 %v83
    %433 = vmatprep.subr.mxu0 0.0
    %434 = vmatpush1.msra.mxu0 0.0
    %435 = vmatprep.subr.mxu0 0.0
    %436 = vmatpush1.msra.mxu0 0.0
    %437 = vmatprep.subr.mxu0 0.0
    %438 = vmatpush1.msra.mxu0 0.0
    %439 = vmatprep.subr.mxu0 0.0
    %440 = vmatpush1.msra.mxu0 0.0
    %441 = vmatprep.subr.mxu0 0.0
    %442 = vmatpush1.msra.mxu0 0.0
    %443 = vmatprep.subr.mxu0 0.0
    %444 = vmatpush1.msra.mxu0 0.0
    %445 = vmatprep.subr.mxu0 0.0
    %446 = vmatpush1.msra.mxu0 0.0
    %447 = vmatprep.subr.mxu0 0.0
    %448 = vmatpush1.msra.mxu0 0.0
    %449 = vmatprep.subr.mxu0 0.0
    %450 = vmatpush1.msra.mxu0 0.0
    %451 = vmatprep.subr.mxu0 0.0
    %452 = vmatpush1.msra.mxu0 0.0
    %453 = vmatprep.subr.mxu0 0.0
    %454 = vmatpush1.msra.mxu0 0.0
    %455 = vmatprep.subr.mxu0 0.0
    %456 = vmatpush1.msra.mxu0 0.0
    %457 = vmatprep.subr.mxu0 0.0
    %458 = vmatpush1.msra.mxu0 0.0
    %459 = vmatprep.subr.mxu0 0.0
    %460 = vmatpush1.msra.mxu0 0.0
    %461 = vmatprep.subr.mxu0 0.0
    %462 = vmatpush1.msra.mxu0 0.0
    %463 = vmatprep.subr.mxu0 0.0
    %464 = vmatpush1.msra.mxu0 0.0
    %465 = vmatprep.mubr.f32.mxu0 0.0
    %466 = vmatmul.mubr.f32.gmra.mrb[0].mxu0 %v326
    %v467 = vpop.f32.mrb[0].mxu0
    %v468 = vadd.f32 0.0, %v467
    %v469 = vpop.f32.mrb[0].mxu0
    %470 = vdwg.mxu0
    %v471 = vmul.f32 %v398, 0.0025
    %v472 = vmul.f32 %v468, 0.0025
    %473 = vst [vmem:[#allocation2] sm:$0xff] %v471
    %474 = vst [vmem:[#allocation2 + $0x8] sm:$0xff] %v472
    // Predicated region
    $region14: #{tpu_custom_call.1} parent=1 // pred_check
      _
    $region15: #{tpu_custom_call.1} parent=1 // pred_check_branch
      %476 = sbr.rel (0) target = $region17
    $region16: #{tpu_custom_call.1} parent=1 // pred_region
      %s478 = ssub.s32 256, 256
      %479 = vsyncadd [#allocation3], %s478
      %s480 = sshll.u32 [#allocation2], 4
      %s481 = int_to_ptr.vmem [resolvable:$true] %s480
      %486 = dma.vmem_to_hbm [thread:$0]  %s481, 256, %s3, [#allocation3], 128, 128, 8
    $region17: #{tpu_custom_call.1} parent=1 // pred_fallthru
      _
    // Predicated region
    $region18: #{tpu_custom_call.1} parent=1 // pred_check
      _
    $region19: #{tpu_custom_call.1} parent=1 // pred_check_branch
      %488 = sbr.rel (0) target = $region21
    $region20: #{tpu_custom_call.1} parent=1 // pred_region
      %s490 = ssub.s32 256, 256
      %491 = vsyncadd [#allocation5], %s490
      %s492 = sshll.u32 [#allocation4], 4
      %s493 = int_to_ptr.vmem [resolvable:$true] %s492
      %498 = dma.vmem_to_hbm [thread:$0]  %s493, 256, %s4, [#allocation5], 128, 128, 8
    $region21: #{tpu_custom_call.1} parent=1 // pred_fallthru
      _
    // Predicated region
    $region22: #{tpu_custom_call.1} parent=1 // pred_check
      _
    $region23: #{tpu_custom_call.1} parent=1 // pred_check_branch
      %500 = sbr.rel (0) target = $region25
    $region24: #{tpu_custom_call.1} parent=1 // pred_region
      %501 = dma.done [#allocation3], 256
    $region25: #{tpu_custom_call.1} parent=1 // pred_fallthru
      _
    // Predicated region
    $region26: #{tpu_custom_call.1} parent=1 // pred_check
      _
    $region27: #{tpu_custom_call.1} parent=1 // pred_check_branch
      %503 = sbr.rel (0) target = $region29
    $region28: #{tpu_custom_call.1} parent=1 // pred_region
      %504 = dma.done [#allocation5], 256
    $region29: #{tpu_custom_call.1} parent=1 // pred_fallthru
      _
    %505 = vsyncpa [#allocation3], 1
    %506 = vsyncpa [#allocation5], 1

</llo_original>
